<compile_context>
chip_gen: v5e
topology: v5e:2x2
jax: 0.10.0
libtpu: 0.0.40
codegen_flags: <defaults>
</compile_context>

<pallas_src>
import functools
import math

import jax
import jax.numpy as jnp
from jax import lax
from jax.experimental import pallas as pl
from jax.experimental.pallas import tpu as pltpu


# ------------------------------------------------------------------ device-aware knobs

@functools.lru_cache(maxsize=None)
def _vmem_limit_bytes():
    """Generation-aware VMEM limit: ~7/8 of physical VMEM (≈112 MiB on v5e/v6e, ≈56 MiB
    on v7x) so bigger tiles are allowed on 128 MiB parts while leaving compiler headroom
    on 64 MiB parts."""
    try:
        cap = int(pltpu.get_tpu_info().vmem_capacity_bytes)
    except Exception:
        cap = 64 * 1024 * 1024          # conservative fallback (fits every generation)
    return max(32 * 1024 * 1024, (cap // 8) * 7)


@functools.lru_cache(maxsize=None)
def _roll_is_right():
    """Probe pltpu.roll's rotation direction once with a tiny kernel so the skew below is
    correct regardless of whether the hardware rotate matches jnp.roll (right-roll)."""
    def k(x_ref, o_ref):
        o_ref[...] = pltpu.roll(x_ref[...], 1, axis=1)
    x = jnp.tile(jnp.arange(128, dtype=jnp.float32), (8, 1))
    y = pl.pallas_call(k, out_shape=jax.ShapeDtypeStruct((8, 128), jnp.float32))(x)
    return bool(y[0, 0] == 127.0)       # right-roll puts x[:, -1] at column 0


def _pick_tile(T, candidates):
    """Largest candidate tile that divides T (keeps the (8,128) constraint satisfied and
    restores DMA/compute pipelining); fall back to the full dim for odd small sizes."""
    for cand in candidates:
        if cand <= T and T % cand == 0:
            return cand
    return T


# ----------------------------------------------------------------------------- linear

def _linear_kernel(x_ref, wt_ref, b_ref, o_ref):
    # o = x @ Wt + b ;  Wt is pre-transposed to (Din, Dout) and bf16 in the wrapper, so
    # the MXU sees a plain row-major bf16 contraction (no per-step relayout of the
    # VMEM-resident weight block) with f32 accumulation.
    x = x_ref[...]
    if x.dtype != jnp.bfloat16:
        x = x.astype(jnp.bfloat16)
    acc = jnp.dot(x, wt_ref[...], preferred_element_type=jnp.float32)
    o_ref[...] = (acc + b_ref[...]).astype(o_ref.dtype)


def linear_pallas(x, w_t, b, out_dtype):
    """Row-tiled y = x @ w_t + b.  x: (T, Din) f32/bf16, w_t: (Din, Dout) bf16, b: (Dout,) f32."""
    T, Din = x.shape
    Dout = w_t.shape[1]
    tm = _pick_tile(T, (512, 256, 128, 64, 32, 16, 8))
    return pl.pallas_call(
        _linear_kernel,
        out_shape=jax.ShapeDtypeStruct((T, Dout), out_dtype),
        grid=(T // tm,),
        in_specs=[
            pl.BlockSpec((tm, Din), lambda i: (i, 0)),
            pl.BlockSpec((Din, Dout), lambda i: (0, 0)),   # weight block stays VMEM-resident
            pl.BlockSpec((1, Dout), lambda i: (0, 0)),
        ],
        out_specs=pl.BlockSpec((tm, Dout), lambda i: (i, 0)),
        compiler_params=pltpu.CompilerParams(
            dimension_semantics=("parallel",),
            vmem_limit_bytes=_vmem_limit_bytes()),
    )(x, w_t, b.reshape(1, Dout))


# ------------------------------------------------------------------- attention w/ RPR

def _attn_rpr_kernel(q_ref, k_ref, v_ref, er_ref, ctx_ref, w_ref, *,
                     num_heads, head_dim, roll_right):
    # q_ref/ctx_ref: (1, tq, E) ; k_ref/v_ref: (1, S, E) ; er_ref: (L, Dh) ; w_ref: (1, tq, S)
    tq = q_ref.shape[1]
    S = k_ref.shape[1]
    L = er_ref.shape[0]          # tgt_len (== S, asserted in the wrapper)

    qb = q_ref[0]                # (tq, E) bf16 — q scaling already folded into W_q / b_q
    kb = k_ref[0]                # (S, E)  bf16
    vb = v_ref[0]                # (S, E)  bf16
    er = er_ref[...]             # (L, Dh) bf16

    # Global query-row indices of this q-tile (grid axis 1 = query tiling).
    row0 = pl.program_id(1) * tq
    grow = row0 + lax.broadcasted_iota(jnp.int32, (tq, 1), 0)      # (tq, 1)
    col = lax.broadcasted_iota(jnp.int32, (tq, S), 1)              # (tq, S)
    causal = col <= grow

    # RPR skew: srel[i, j] = qe[i, j - i + L - 1] * [j <= i]  ==  right-roll row i of qe by
    # (i + 1) mod L, then causal-mask.  The per-row roll is decomposed into log2(L) static
    # pltpu.roll lane rotations (one XLU op each) selected per row by its shift bits.
    want = (grow + 1) % L
    shift = want if roll_right else (L - want) % L     # compensate native roll direction
    nbits = max(1, (L - 1).bit_length())
    bit_masks = [((shift // (1 << b)) % 2) == 1 for b in range(nbits)]

    def _skew(qe):
        cur = qe
        for b in range(nbits):
            cur = jnp.where(bit_masks[b], pltpu.roll(cur, 1 << b, axis=1), cur)
        return jnp.where(causal, cur, 0.0)

    contract = (((1,), (1,)), ((), ()))     # a @ b.T on the MXU (no materialized transpose)
    inv_h = 1.0 / float(num_heads)
    w_acc = jnp.zeros((tq, S), jnp.float32)

    for h in range(num_heads):              # static unroll over heads of this (batch, q-tile)
        lo = h * head_dim
        hi = lo + head_dim
        q_h = qb[:, lo:hi]                  # (tq, Dh) bf16 static lane slice
        k_h = kb[:, lo:hi]
        v_h = vb[:, lo:hi]

        scores = lax.dot_general(q_h, k_h, contract, preferred_element_type=jnp.float32)  # (tq,S)
        qe = lax.dot_general(q_h, er, contract, preferred_element_type=jnp.float32)       # (tq,L)
        logits = scores + _skew(qe)

        m = jnp.max(logits, axis=-1, keepdims=True)
        p = jnp.exp(logits - m)
        attn = p * pl.reciprocal(jnp.sum(p, axis=-1, keepdims=True), approx=True)

        # Write each head's context straight into its lane slice of the output block: no
        # ctx_parts list + concat, per-head temporaries die immediately (lower VMEM peak).
        ctx_ref[0, :, lo:hi] = jnp.dot(
            attn.astype(jnp.bfloat16), v_h,
            preferred_element_type=jnp.float32).astype(ctx_ref.dtype)
        w_acc = w_acc + attn                # head-averaged weights accumulated in-kernel

    w_ref[0] = (w_acc * inv_h).astype(w_ref.dtype)


def attention_rpr_pallas(q_src, k_src, v_src, er_valid, *, num_heads, head_dim, fused_qkv):
    N, L = q_src.shape[0], q_src.shape[1]
    S = k_src.shape[1]
    E = num_heads * head_dim
    tq = _pick_tile(L, (256, 128, 64, 32, 16, 8))   # query tiling bounds the (tq,S) working set
    kernel = functools.partial(_attn_rpr_kernel, num_heads=num_heads,
                               head_dim=head_dim, roll_right=_roll_is_right())
    if fused_qkv:
        # q/k/v are column blocks 0/1/2 of the same fused (N, L, 3E) projection; K/V index
        # maps are independent of the q-tile index, so they stay resident across q-tiles.
        in_specs = [
            pl.BlockSpec((1, tq, E), lambda b, qi: (b, qi, 0)),
            pl.BlockSpec((1, S, E), lambda b, qi: (b, 0, 1)),
            pl.BlockSpec((1, S, E), lambda b, qi: (b, 0, 2)),
            pl.BlockSpec((L, head_dim), lambda b, qi: (0, 0)),
        ]
    else:
        in_specs = [
            pl.BlockSpec((1, tq, E), lambda b, qi: (b, qi, 0)),
            pl.BlockSpec((1, S, E), lambda b, qi: (b, 0, 0)),
            pl.BlockSpec((1, S, E), lambda b, qi: (b, 0, 0)),
            pl.BlockSpec((L, head_dim), lambda b, qi: (0, 0)),
        ]
    return pl.pallas_call(
        kernel,
        out_shape=(jax.ShapeDtypeStruct((N, L, E), q_src.dtype),     # bf16 context
                   jax.ShapeDtypeStruct((N, L, S), jnp.float32)),    # head-averaged weights
        grid=(N, L // tq),
        in_specs=in_specs,
        out_specs=(pl.BlockSpec((1, tq, E), lambda b, qi: (b, qi, 0)),
                   pl.BlockSpec((1, tq, S), lambda b, qi: (b, qi, 0))),
        compiler_params=pltpu.CompilerParams(
            dimension_semantics=("parallel", "parallel"),   # independent per (batch, q-tile)
            vmem_limit_bytes=_vmem_limit_bytes()),
    )(q_src, k_src, v_src, er_valid)


# ---------------------------------------------------------------------- module forward

def multihead_attention_rpr_forward(query, key, value, params, num_heads):
    """Forward of MultiheadAttentionRPR (need_weights=True, no masks, dropout=0)."""
    L, N, E = query.shape
    S = key.shape[0]
    H = num_heads
    Dh = E // H
    scaling = float(Dh) ** -0.5

    Er = params["Er"]
    assert Er.shape[0] >= L, "er_len must be >= tgt_len (required by the reference skew)"
    assert S == L, "the RPR skew (as in the reference) requires src_len == tgt_len"
    er_valid = Er[Er.shape[0] - L:].astype(jnp.bfloat16)            # _get_valid_embedding

    # One-time wrapper-side weight prep: fold the 1/sqrt(Dh) q-scaling into W_q / b_q,
    # pre-transpose to (Din, Dout), cast matmul operands to bf16 (f32 accumulation kept).
    W = params["in_proj_weight"]                                    # (3E, E)
    b = params["in_proj_bias"]                                      # (3E,)
    scale_vec = jnp.concatenate([jnp.full((E,), scaling, W.dtype),
                                 jnp.ones((2 * E,), W.dtype)])
    Wt = jnp.transpose(W * scale_vec[:, None]).astype(jnp.bfloat16)  # (E, 3E)
    b_scaled = b * scale_vec                                          # f32
    Wo_t = jnp.transpose(params["out_proj_weight"]).astype(jnp.bfloat16)
    bo = params["out_proj_bias"]

    same = (query is key) and (key is value)        # NOTE: object identity, as in torch
    fused = same and (E % 128 == 0)

    if fused:
        # Fused QKV projection: x read from HBM once, one (T, 3E) bf16 output slab.
        x_nl = jnp.transpose(query, (1, 0, 2)).reshape(N * L, E)
        qkv = linear_pallas(x_nl, Wt, b_scaled, out_dtype=jnp.bfloat16).reshape(N, L, 3 * E)
        q_src = k_src = v_src = qkv
    else:
        q_nl = jnp.transpose(query, (1, 0, 2)).reshape(N * L, E)
        k_nl = jnp.transpose(key, (1, 0, 2)).reshape(N * S, E)
        v_nl = jnp.transpose(value, (1, 0, 2)).reshape(N * S, E)
        q_src = linear_pallas(q_nl, Wt[:, :E], b_scaled[:E],
                              out_dtype=jnp.bfloat16).reshape(N, L, E)
        k_src = linear_pallas(k_nl, Wt[:, E:2 * E], b_scaled[E:2 * E],
                              out_dtype=jnp.bfloat16).reshape(N, S, E)
        v_src = linear_pallas(v_nl, Wt[:, 2 * E:], b_scaled[2 * E:],
                              out_dtype=jnp.bfloat16).reshape(N, S, E)

    ctx, attn_weights = attention_rpr_pallas(
        q_src, k_src, v_src, er_valid,
        num_heads=H, head_dim=Dh, fused_qkv=fused)

    out = linear_pallas(ctx.reshape(N * L, E), Wo_t, bo, out_dtype=query.dtype)
    out = jnp.transpose(out.reshape(N, L, E), (1, 0, 2))             # back to (L, N, E)
    return out, attn_weights


# ------------------------------------------------------------------ pure-JAX reference

def _skew_ref(qe):
    H, L, M = qe.shape
    mask = jnp.flip(jnp.triu(jnp.ones((L, L), qe.dtype)), axis=0)
    qe = qe * mask
    qe = jnp.pad(qe, ((0, 0), (0, 0), (1, 0)))
    qe = qe.reshape(H, M + 1, L)
    return qe[:, 1:, :]


def ref_forward(query, key, value, params, num_heads):
    L, N, E = query.shape
    S = key.shape[0]
    H = num_heads
    Dh = E // H
    scaling = float(Dh) ** -0.5

    W = params["in_proj_weight"]
    b = params["in_proj_bias"]
    q = query @ W[:E].T + b[:E]
    k = key @ W[E:2 * E].T + b[E:2 * E]
    v = value @ W[2 * E:].T + b[2 * E:]

    q = q * scaling
    qh = q.reshape(L, N * H, Dh).transpose(1, 0, 2)
    kh = k.reshape(S, N * H, Dh).transpose(1, 0, 2)
    vh = v.reshape(S, N * H, Dh).transpose(1, 0, 2)

    attn = jnp.einsum("bld,bsd->bls", qh, kh)
    er_valid = params["Er"][params["Er"].shape[0] - L:]
    qe = jnp.einsum("bld,md->blm", qh, er_valid)
    attn = attn + _skew_ref(qe)
    attn = jax.nn.softmax(attn, axis=-1)
    ctx = jnp.einsum("bls,bsd->bld", attn, vh)
    ctx = ctx.transpose(1, 0, 2).reshape(L, N, E)
    out = ctx @ params["out_proj_weight"].T + params["out_proj_bias"]
    attn_weights = attn.reshape(N, H, L, S).sum(axis=1) / H
    return out, attn_weights


# ---------------------------------------------------------------------------- __main__

if __name__ == "__main__":
    E = 128       # embed_dim
    H = 4         # num_heads
    Dh = E // H   # head_dim = 32
    L = 128       # tgt seq len
    S = 128       # src seq len (must equal L for the skew, as in the reference)
    N = 2         # batch
    ER_LEN = 160  # er_len >= L

    key = jax.random.PRNGKey(0)
    k1, k2, k3, k4 = jax.random.split(key, 4)

    # Deterministic parameter init (shapes from __init__; synthetic values).
    xav = math.sqrt(6.0 / (3 * E + E))                       # xavier_uniform_ bound
    in_proj_weight = jax.random.uniform(k1, (3 * E, E), jnp.float32, -xav, xav)
    in_proj_bias = jnp.zeros((3 * E,), jnp.float32)          # constant_(0.0)
    ob = 1.0 / math.sqrt(E)
    out_proj_weight = jax.random.uniform(k2, (E, E), jnp.float32, -ob, ob)
    out_proj_bias = jnp.zeros((E,), jnp.float32)             # constant_(0.0)
    Er = jax.random.uniform(k3, (ER_LEN, Dh), jnp.float32)   # torch.rand

    params = dict(
        in_proj_weight=in_proj_weight,
        in_proj_bias=in_proj_bias,
        out_proj_weight=out_proj_weight,
        out_proj_bias=out_proj_bias,
        Er=Er,
    )

    # Self-attention inputs, (L, N, E).
    x = jax.random.normal(k4, (L, N, E), jnp.float32)
    query = key_ = value = x

    out, attn_w = multihead_attention_rpr_forward(query, key_, value, params, H)
    out = jax.block_until_ready(out)
    attn_w = jax.block_until_ready(attn_w)

    out_ref, attn_w_ref = ref_forward(query, key_, value, params, H)

    assert out.shape == (L, N, E) and attn_w.shape == (N, L, S)
    # bf16 MXU operands (f32 accumulation) -> bf16-appropriate tolerance vs the f32 reference.
    assert jnp.allclose(out, out_ref, rtol=3e-2, atol=3e-2), "attn output mismatch"
    assert jnp.allclose(attn_w, attn_w_ref, rtol=3e-2, atol=3e-2), "attn weights mismatch"

    print("KERNEL_OK")
</pallas_src>

<mosaic_0001>
module attributes {stable_mosaic.version = 11 : i64} {
  func.func @_linear_kernel(%arg0: i32, %arg1: memref<256x128xf32, #tpu.memory_space<vmem>>, %arg2: memref<128x384xbf16, #tpu.memory_space<vmem>>, %arg3: memref<1x384xf32, #tpu.memory_space<vmem>>, %arg4: memref<256x384xbf16, #tpu.memory_space<vmem>>) attributes {dimension_semantics = [#tpu.dimension_semantics<parallel>], iteration_bounds = array<i64: 1>, scalar_prefetch = 0 : i64, scratch_operands = 0 : i64, tpu.core_type = #tpu.core_type<tc>, window_params = [{transform_indices = @transform_0, window_bounds = array<i64: 256, 128>}, {pipeline_mode = #tpu.pipeline_mode<synchronous>, transform_indices = @transform_1, window_bounds = array<i64: 128, 384>}, {pipeline_mode = #tpu.pipeline_mode<synchronous>, transform_indices = @transform_2, window_bounds = array<i64: 1, 384>}, {transform_indices = @transform_3, window_bounds = array<i64: 256, 384>}]} {
    %c0 = arith.constant 0 : index
    %c0_0 = arith.constant 0 : index
    %0 = vector.load %arg1[%c0, %c0_0] : memref<256x128xf32, #tpu.memory_space<vmem>>, vector<256x128xf32>
    %1 = arith.truncf %0 : vector<256x128xf32> to vector<256x128xbf16>
    %c0_1 = arith.constant 0 : index
    %c0_2 = arith.constant 0 : index
    %2 = vector.load %arg2[%c0_1, %c0_2] : memref<128x384xbf16, #tpu.memory_space<vmem>>, vector<128x384xbf16>
    %cst = arith.constant dense<0.000000e+00> : vector<256x384xf32>
    %3 = tpu.matmul %1, %2, %cst {dimension_numbers = #tpu.dot_dimension_numbers<[1], [0], [0], [1], [0, 0, 1, 1], [], []>} : vector<256x128xbf16>, vector<128x384xbf16>, vector<256x384xf32> -> vector<256x384xf32>
    %c0_3 = arith.constant 0 : index
    %c0_4 = arith.constant 0 : index
    %4 = vector.load %arg3[%c0_3, %c0_4] : memref<1x384xf32, #tpu.memory_space<vmem>>, vector<1x384xf32>
    %5 = vector.broadcast %4 : vector<1x384xf32> to vector<256x384xf32>
    %6 = arith.addf %3, %5 : vector<256x384xf32>
    %7 = arith.truncf %6 : vector<256x384xf32> to vector<256x384xbf16>
    %c0_5 = arith.constant 0 : index
    %c0_6 = arith.constant 0 : index
    %8 = vector.load %arg4[%c0_5, %c0_6] : memref<256x384xbf16, #tpu.memory_space<vmem>>, vector<256x384xbf16>
    tpu.vector_store %arg4[%c0_5, %c0_6], %7 {strides = array<i32>} : memref<256x384xbf16, #tpu.memory_space<vmem>>, vector<256x384xbf16>,
    return
  }
  func.func @transform_0(%arg0: i32) -> (i32, i32) {
    %c0_i32 = arith.constant 0 : i32
    %c0_i32_0 = arith.constant 0 : i32
    return %arg0, %c0_i32 : i32, i32
  }
  func.func @transform_1(%arg0: i32) -> (i32, i32) {
    %c0_i32 = arith.constant 0 : i32
    %c0_i32_0 = arith.constant 0 : i32
    %c0_i32_1 = arith.constant 0 : i32
    return %c0_i32, %c0_i32_0 : i32, i32
  }
  func.func @transform_2(%arg0: i32) -> (i32, i32) {
    %c0_i32 = arith.constant 0 : i32
    %c0_i32_0 = arith.constant 0 : i32
    %c0_i32_1 = arith.constant 0 : i32
    return %c0_i32, %c0_i32_0 : i32, i32
  }
  func.func @transform_3(%arg0: i32) -> (i32, i32) {
    %c0_i32 = arith.constant 0 : i32
    %c0_i32_0 = arith.constant 0 : i32
    return %arg0, %c0_i32 : i32, i32
  }
}

</mosaic_0001>

<llo_original>
// kernel: tpu_custom_call.1
$region0: #{tpu_custom_call.1}
  #allocation0 [shape = 'u32[]', space=smem, size = 0x4, offset = 0x4, fixed_abs, tag = 'smem constant byte address 0x4 - core index']
  #allocation1 [shape = 'u32[72,128]{1,0:T(1,128)}', space=vmem, size = 0x9000, scoped, tag = 'internal scratch']
  %s0 = inlined_call_operand.hbm [shape: f32[256,128], index: 0, kind: input, shape index: {}]
  %s1 = inlined_call_operand.hbm [shape: bf16[128,384], index: 1, kind: input, shape index: {}]
  %s2 = inlined_call_operand.hbm [shape: f32[1,384], index: 2, kind: input, shape index: {}]
  %s3 = inlined_call_operand.hbm [shape: bf16[256,384], index: 3, kind: output, shape index: {}]
  %s4 = sld [smem:[#allocation0]]
  $region34: #{tpu_custom_call.1} parent=0
    _
  %s6 = ssub.s32 1, %s4
  %s7 = scalar_select 0, %s6, %s4
  $region1: #{tpu_custom_call.1} parent=0
    #allocation2 [shape = 'u8[131072]{0}', space=vmem, size = 0x20000, scoped, tag = 'input window, operand 0, single buffered']
    #allocation3 [shape = 's32[1]{0}', space=sflag, size = 0x4, scoped, tag = 'scoped memory for tpu_custom_call.1']
    #allocation4 [shape = 's32[1]{0}', space=sflag, size = 0x4, scoped, tag = 'scoped memory for tpu_custom_call.1']
    #allocation5 [shape = 'u8[98304]{0}', space=vmem, size = 0x18000, scoped, tag = 'input window, operand 1, single buffered']
    #allocation6 [shape = 's32[1]{0}', space=sflag, size = 0x4, scoped, tag = 'scoped memory for tpu_custom_call.1']
    #allocation7 [shape = 'u8[1536]{0}', space=vmem, size = 0x800, scoped, tag = 'input window, operand 2, single buffered']
    #allocation8 [shape = 'u8[196608]{0}', space=vmem, size = 0x30000, scoped, tag = 'output window, operand 0, single buffered']
    %8 = vsyncpa [#allocation3], 0
    %9 = vsyncpa [#allocation6], 0
    %10 = vsyncpa [#allocation4], 0
    // Predicated region
    $region2: #{tpu_custom_call.1} parent=1 // pred_check
      _
    $region3: #{tpu_custom_call.1} parent=1 // pred_check_branch
      %12 = sbr.rel (0) target = $region5
    $region4: #{tpu_custom_call.1} parent=1 // pred_region
      %14 = vsyncadd [#allocation3], 0
      %s15 = sshll.u32 %s0, 4
      %s16 = int_to_ptr.hbm [resolvable:$true] %s15
      %s17 = sshll.u32 [#allocation2], 4
      %s18 = int_to_ptr.vmem [resolvable:$true] %s17
      %23 = dma.hbm_to_vmem [thread:$0]  %s16, 4096, %s18, [#allocation3], 128, 128, 8
    $region5: #{tpu_custom_call.1} parent=1 // pred_fallthru
      _
    // Predicated region
    $region6: #{tpu_custom_call.1} parent=1 // pred_check
      _
    $region7: #{tpu_custom_call.1} parent=1 // pred_check_branch
      %25 = sbr.rel (0) target = $region9
    $region8: #{tpu_custom_call.1} parent=1 // pred_region
      %27 = vsyncadd [#allocation6], 0
      %s28 = sshll.u32 %s1, 4
      %s29 = int_to_ptr.hbm [resolvable:$true] %s28
      %s30 = sshll.u32 [#allocation5], 4
      %s31 = int_to_ptr.vmem [resolvable:$true] %s30
      %36 = dma.hbm_to_vmem [thread:$0]  %s29, 3072, %s31, [#allocation6], 192, 192, 12
    $region9: #{tpu_custom_call.1} parent=1 // pred_fallthru
      _
    // Predicated region
    $region10: #{tpu_custom_call.1} parent=1 // pred_check
      _
    $region11: #{tpu_custom_call.1} parent=1 // pred_check_branch
      %38 = sbr.rel (0) target = $region13
    $region12: #{tpu_custom_call.1} parent=1 // pred_region
      %40 = vsyncadd [#allocation6], 0
      %s42 = sshll.u32 %s2, 4
      %s43 = int_to_ptr.hbm [resolvable:$true] %s42
      %s44 = sshll.u32 [#allocation7], 4
      %s45 = int_to_ptr.vmem [resolvable:$true] %s44
      %47 = dma.hbm_to_vmem [thread:$0]  %s43, 48, %s45, [#allocation6]
    $region13: #{tpu_custom_call.1} parent=1 // pred_fallthru
      _
    // Predicated region
    $region14: #{tpu_custom_call.1} parent=1 // pred_check
      _
    $region15: #{tpu_custom_call.1} parent=1 // pred_check_branch
      %49 = sbr.rel (0) target = $region17
    $region16: #{tpu_custom_call.1} parent=1 // pred_region
      %51 = dma.done [#allocation3], 4096
    $region17: #{tpu_custom_call.1} parent=1 // pred_fallthru
      _
    // Predicated region
    $region18: #{tpu_custom_call.1} parent=1 // pred_check
      _
    $region19: #{tpu_custom_call.1} parent=1 // pred_check_branch
      %53 = sbr.rel (0) target = $region21
    $region20: #{tpu_custom_call.1} parent=1 // pred_region
      %55 = dma.done [#allocation6], 3072
    $region21: #{tpu_custom_call.1} parent=1 // pred_fallthru
      _
    // Predicated region
    $region22: #{tpu_custom_call.1} parent=1 // pred_check
      _
    $region23: #{tpu_custom_call.1} parent=1 // pred_check_branch
      %57 = sbr.rel (0) target = $region25
    $region24: #{tpu_custom_call.1} parent=1 // pred_region
      %59 = dma.done [#allocation6], 48
    $region25: #{tpu_custom_call.1} parent=1 // pred_fallthru
      _
    %v60 = vld [vmem:[#allocation2] sm:$0xff]
    %v61 = vld [vmem:[#allocation2 + $0x8] sm:$0xff]
    %v62 = vld [vmem:[#allocation2 + $0x10] sm:$0xff]
    %v63 = vld [vmem:[#allocation2 + $0x18] sm:$0xff]
    %v64 = vld [vmem:[#allocation2 + $0x20] sm:$0xff]
    %v65 = vld [vmem:[#allocation2 + $0x28] sm:$0xff]
    %v66 = vld [vmem:[#allocation2 + $0x30] sm:$0xff]
    %v67 = vld [vmem:[#allocation2 + $0x38] sm:$0xff]
    %v68 = vld [vmem:[#allocation2 + $0x40] sm:$0xff]
    %v69 = vld [vmem:[#allocation2 + $0x48] sm:$0xff]
    %v70 = vld [vmem:[#allocation2 + $0x50] sm:$0xff]
    %v71 = vld [vmem:[#allocation2 + $0x58] sm:$0xff]
    %v72 = vld [vmem:[#allocation2 + $0x60] sm:$0xff]
    %v73 = vld [vmem:[#allocation2 + $0x68] sm:$0xff]
    %v74 = vld [vmem:[#allocation2 + $0x70] sm:$0xff]
    %v75 = vld [vmem:[#allocation2 + $0x78] sm:$0xff]
    %v76 = vld [vmem:[#allocation2 + $0x80] sm:$0xff]
    %v77 = vld [vmem:[#allocation2 + $0x88] sm:$0xff]
    %v78 = vld [vmem:[#allocation2 + $0x90] sm:$0xff]
    %v79 = vld [vmem:[#allocation2 + $0x98] sm:$0xff]
    %v80 = vld [vmem:[#allocation2 + $0xa0] sm:$0xff]
    %v81 = vld [vmem:[#allocation2 + $0xa8] sm:$0xff]
    %v82 = vld [vmem:[#allocation2 + $0xb0] sm:$0xff]
    %v83 = vld [vmem:[#allocation2 + $0xb8] sm:$0xff]
    %v84 = vld [vmem:[#allocation2 + $0xc0] sm:$0xff]
    %v85 = vld [vmem:[#allocation2 + $0xc8] sm:$0xff]
    %v86 = vld [vmem:[#allocation2 + $0xd0] sm:$0xff]
    %v87 = vld [vmem:[#allocation2 + $0xd8] sm:$0xff]
    %v88 = vld [vmem:[#allocation2 + $0xe0] sm:$0xff]
    %v89 = vld [vmem:[#allocation2 + $0xe8] sm:$0xff]
    %v90 = vld [vmem:[#allocation2 + $0xf0] sm:$0xff]
    %v91 = vld [vmem:[#allocation2 + $0xf8] sm:$0xff]
    %v92 = vpack.c.bf16 %v61, %v60
    %v93 = vpack.c.bf16 %v63, %v62
    %v94 = vpack.c.bf16 %v65, %v64
    %v95 = vpack.c.bf16 %v67, %v66
    %v96 = vpack.c.bf16 %v69, %v68
    %v97 = vpack.c.bf16 %v71, %v70
    %v98 = vpack.c.bf16 %v73, %v72
    %v99 = vpack.c.bf16 %v75, %v74
    %v100 = vpack.c.bf16 %v77, %v76
    %v101 = vpack.c.bf16 %v79, %v78
    %v102 = vpack.c.bf16 %v81, %v80
    %v103 = vpack.c.bf16 %v83, %v82
    %v104 = vpack.c.bf16 %v85, %v84
    %v105 = vpack.c.bf16 %v87, %v86
    %v106 = vpack.c.bf16 %v89, %v88
    %v107 = vpack.c.bf16 %v91, %v90
    %v108 = vld [vmem:[#allocation5] sm:$0xff]
    %v109 = vld [vmem:[#allocation5 + $0x8] sm:$0xf]
    %v110 = vld [vmem:[#allocation5 + $0xc] sm:$0xff]
    %v111 = vld [vmem:[#allocation5 + $0x14] sm:$0xf]
    %v112 = vld [vmem:[#allocation5 + $0x18] sm:$0xff]
    %v113 = vld [vmem:[#allocation5 + $0x20] sm:$0xf]
    %v114 = vld [vmem:[#allocation5 + $0x24] sm:$0xff]
    %v115 = vld [vmem:[#allocation5 + $0x2c] sm:$0xf]
    %v116 = vld [vmem:[#allocation5 + $0x30] sm:$0xff]
    %v117 = vld [vmem:[#allocation5 + $0x38] sm:$0xf]
    %v118 = vld [vmem:[#allocation5 + $0x3c] sm:$0xff]
    %v119 = vld [vmem:[#allocation5 + $0x44] sm:$0xf]
    %v120 = vld [vmem:[#allocation5 + $0x48] sm:$0xff]
    %v121 = vld [vmem:[#allocation5 + $0x50] sm:$0xf]
    %v122 = vld [vmem:[#allocation5 + $0x54] sm:$0xff]
    %v123 = vld [vmem:[#allocation5 + $0x5c] sm:$0xf]
    %v124 = vld [vmem:[#allocation5 + $0x60] sm:$0xff]
    %v125 = vld [vmem:[#allocation5 + $0x68] sm:$0xf]
    %v126 = vld [vmem:[#allocation5 + $0x6c] sm:$0xff]
    %v127 = vld [vmem:[#allocation5 + $0x74] sm:$0xf]
    %v128 = vld [vmem:[#allocation5 + $0x78] sm:$0xff]
    %v129 = vld [vmem:[#allocation5 + $0x80] sm:$0xf]
    %v130 = vld [vmem:[#allocation5 + $0x84] sm:$0xff]
    %v131 = vld [vmem:[#allocation5 + $0x8c] sm:$0xf]
    %v132 = vld [vmem:[#allocation5 + $0x90] sm:$0xff]
    %v133 = vld [vmem:[#allocation5 + $0x98] sm:$0xf]
    %v134 = vld [vmem:[#allocation5 + $0x9c] sm:$0xff]
    %v135 = vld [vmem:[#allocation5 + $0xa4] sm:$0xf]
    %v136 = vld [vmem:[#allocation5 + $0xa8] sm:$0xff]
    %v137 = vld [vmem:[#allocation5 + $0xb0] sm:$0xf]
    %v138 = vld [vmem:[#allocation5 + $0xb4] sm:$0xff]
    %v139 = vld [vmem:[#allocation5 + $0xbc] sm:$0xf]
    %v140 = vld [vmem:[#allocation7] sm:$0x7]
    %v142 = vperm.slane %v140, 0
    %v143 = vperm.slane %v140, 1
    %v144 = vperm.slane %v140, 2
    %v180 = vunpack.c.l.b16 %v108
    %v181 = vunpack.c.h.b16 %v108
    %v182 = vunpack.c.l.b16 %v109
    %v183 = vunpack.c.l.b16 %v110
    %v184 = vunpack.c.h.b16 %v110
    %v185 = vunpack.c.l.b16 %v111
    %v186 = vunpack.c.l.b16 %v112
    %v187 = vunpack.c.h.b16 %v112
    %v188 = vunpack.c.l.b16 %v113
    %v189 = vunpack.c.l.b16 %v114
    %v190 = vunpack.c.h.b16 %v114
    %v191 = vunpack.c.l.b16 %v115
    %v192 = vunpack.c.l.b16 %v116
    %v193 = vunpack.c.h.b16 %v116
    %v194 = vunpack.c.l.b16 %v117
    %v195 = vunpack.c.l.b16 %v118
    %v196 = vunpack.c.h.b16 %v118
    %v197 = vunpack.c.l.b16 %v119
    %v198 = vunpack.c.l.b16 %v120
    %v199 = vunpack.c.h.b16 %v120
    %v200 = vunpack.c.l.b16 %v121
    %v201 = vunpack.c.l.b16 %v122
    %v202 = vunpack.c.h.b16 %v122
    %v203 = vunpack.c.l.b16 %v123
    %v204 = vunpack.c.l.b16 %v124
    %v205 = vunpack.c.h.b16 %v124
    %v206 = vunpack.c.l.b16 %v125
    %v207 = vunpack.c.l.b16 %v126
    %v208 = vunpack.c.h.b16 %v126
    %v209 = vunpack.c.l.b16 %v127
    %v210 = vunpack.c.l.b16 %v128
    %v211 = vunpack.c.h.b16 %v128
    %v212 = vunpack.c.l.b16 %v129
    %v213 = vunpack.c.l.b16 %v130
    %v214 = vunpack.c.h.b16 %v130
    %v215 = vunpack.c.l.b16 %v131
    %v216 = vunpack.c.l.b16 %v132
    %v217 = vunpack.c.h.b16 %v132
    %v218 = vunpack.c.l.b16 %v133
    %v219 = vunpack.c.l.b16 %v134
    %v220 = vunpack.c.h.b16 %v134
    %v221 = vunpack.c.l.b16 %v135
    %v222 = vunpack.c.l.b16 %v136
    %v223 = vunpack.c.h.b16 %v136
    %v224 = vunpack.c.l.b16 %v137
    %v225 = vunpack.c.l.b16 %v138
    %v226 = vunpack.c.h.b16 %v138
    %v227 = vunpack.c.l.b16 %v139
    %v228 = vpack.c.b16 %v183, %v180
    %v229 = vpack.c.b16 %v184, %v181
    %v230 = vpack.c.b16 %v185, %v182
    %v231 = vpack.c.b16 %v189, %v186
    %v232 = vpack.c.b16 %v190, %v187
    %v233 = vpack.c.b16 %v191, %v188
    %v234 = vpack.c.b16 %v195, %v192
    %v235 = vpack.c.b16 %v196, %v193
    %v236 = vpack.c.b16 %v197, %v194
    %v237 = vpack.c.b16 %v201, %v198
    %v238 = vpack.c.b16 %v202, %v199
    %v239 = vpack.c.b16 %v203, %v200
    %v240 = vpack.c.b16 %v207, %v204
    %v241 = vpack.c.b16 %v208, %v205
    %v242 = vpack.c.b16 %v209, %v206
    %v243 = vpack.c.b16 %v213, %v210
    %v244 = vpack.c.b16 %v214, %v211
    %v245 = vpack.c.b16 %v215, %v212
    %v246 = vpack.c.b16 %v219, %v216
    %v247 = vpack.c.b16 %v220, %v217
    %v248 = vpack.c.b16 %v221, %v218
    %v249 = vpack.c.b16 %v225, %v222
    %v250 = vpack.c.b16 %v226, %v223
    %v251 = vpack.c.b16 %v227, %v224
    %276 = vmatpush.bf16.msra.mxu0 %v249
    %277 = vmatpush.bf16.msra.mxu0 %v246
    %278 = vmatpush.bf16.msra.mxu0 %v243
    %279 = vmatpush.bf16.msra.mxu0 %v240
    %280 = vmatpush.bf16.msra.mxu0 %v237
    %281 = vmatpush.bf16.msra.mxu0 %v234
    %282 = vmatpush.bf16.msra.mxu0 %v231
    %283 = vmatpush.bf16.msra.mxu0 %v228
    %284 = vmatmul.bf16.gmra.mxu0 %v92
    %v285 = vpop.f32.mrf.mxu0
    %v286 = vadd.f32 %v142, %v285
    %v287 = vpop.f32.mrf.mxu0
    %v288 = vadd.f32 %v142, %v287
    %289 = vmatmul.bf16.gmra.mxu0 %v93
    %v290 = vpop.f32.mrf.mxu0
    %v291 = vadd.f32 %v142, %v290
    %v292 = vpop.f32.mrf.mxu0
    %v293 = vadd.f32 %v142, %v292
    %294 = vmatmul.bf16.gmra.mxu0 %v94
    %v295 = vpop.f32.mrf.mxu0
    %v296 = vadd.f32 %v142, %v295
    %v297 = vpop.f32.mrf.mxu0
    %v298 = vadd.f32 %v142, %v297
    %299 = vmatmul.bf16.gmra.mxu0 %v95
    %v300 = vpop.f32.mrf.mxu0
    %v301 = vadd.f32 %v142, %v300
    %v302 = vpop.f32.mrf.mxu0
    %v303 = vadd.f32 %v142, %v302
    %304 = vmatmul.bf16.gmra.mxu0 %v96
    %v305 = vpop.f32.mrf.mxu0
    %v306 = vadd.f32 %v142, %v305
    %v307 = vpop.f32.mrf.mxu0
    %v308 = vadd.f32 %v142, %v307
    %309 = vmatmul.bf16.gmra.mxu0 %v97
    %v310 = vpop.f32.mrf.mxu0
    %v311 = vadd.f32 %v142, %v310
    %v312 = vpop.f32.mrf.mxu0
    %v313 = vadd.f32 %v142, %v312
    %314 = vmatmul.bf16.gmra.mxu0 %v98
    %v315 = vpop.f32.mrf.mxu0
    %v316 = vadd.f32 %v142, %v315
    %v317 = vpop.f32.mrf.mxu0
    %v318 = vadd.f32 %v142, %v317
    %319 = vmatmul.bf16.gmra.mxu0 %v99
    %v320 = vpop.f32.mrf.mxu0
    %v321 = vadd.f32 %v142, %v320
    %v322 = vpop.f32.mrf.mxu0
    %v323 = vadd.f32 %v142, %v322
    %324 = vmatmul.bf16.gmra.mxu0 %v100
    %v325 = vpop.f32.mrf.mxu0
    %v326 = vadd.f32 %v142, %v325
    %v327 = vpop.f32.mrf.mxu0
    %v328 = vadd.f32 %v142, %v327
    %329 = vmatmul.bf16.gmra.mxu0 %v101
    %v330 = vpop.f32.mrf.mxu0
    %v331 = vadd.f32 %v142, %v330
    %v332 = vpop.f32.mrf.mxu0
    %v333 = vadd.f32 %v142, %v332
    %334 = vmatmul.bf16.gmra.mxu0 %v102
    %v335 = vpop.f32.mrf.mxu0
    %v336 = vadd.f32 %v142, %v335
    %v337 = vpop.f32.mrf.mxu0
    %v338 = vadd.f32 %v142, %v337
    %339 = vmatmul.bf16.gmra.mxu0 %v103
    %v340 = vpop.f32.mrf.mxu0
    %v341 = vadd.f32 %v142, %v340
    %v342 = vpop.f32.mrf.mxu0
    %v343 = vadd.f32 %v142, %v342
    %344 = vmatmul.bf16.gmra.mxu0 %v104
    %v345 = vpop.f32.mrf.mxu0
    %v346 = vadd.f32 %v142, %v345
    %v347 = vpop.f32.mrf.mxu0
    %v348 = vadd.f32 %v142, %v347
    %349 = vmatmul.bf16.gmra.mxu0 %v105
    %v350 = vpop.f32.mrf.mxu0
    %v351 = vadd.f32 %v142, %v350
    %v352 = vpop.f32.mrf.mxu0
    %v353 = vadd.f32 %v142, %v352
    %354 = vmatmul.bf16.gmra.mxu0 %v106
    %v355 = vpop.f32.mrf.mxu0
    %v356 = vadd.f32 %v142, %v355
    %v357 = vpop.f32.mrf.mxu0
    %v358 = vadd.f32 %v142, %v357
    %359 = vmatmul.bf16.gmra.mxu0 %v107
    %v360 = vpop.f32.mrf.mxu0
    %v361 = vadd.f32 %v142, %v360
    %v362 = vpop.f32.mrf.mxu0
    %v363 = vadd.f32 %v142, %v362
    %364 = vdwg.mxu0
    %365 = vmatpush.bf16.msra.mxu0 %v250
    %366 = vmatpush.bf16.msra.mxu0 %v247
    %367 = vmatpush.bf16.msra.mxu0 %v244
    %368 = vmatpush.bf16.msra.mxu0 %v241
    %369 = vmatpush.bf16.msra.mxu0 %v238
    %370 = vmatpush.bf16.msra.mxu0 %v235
    %371 = vmatpush.bf16.msra.mxu0 %v232
    %372 = vmatpush.bf16.msra.mxu0 %v229
    %373 = vmatmul.bf16.gmra.mxu0 %v92
    %v374 = vpop.f32.mrf.mxu0
    %v375 = vadd.f32 %v143, %v374
    %v376 = vpop.f32.mrf.mxu0
    %v377 = vadd.f32 %v143, %v376
    %378 = vmatmul.bf16.gmra.mxu0 %v93
    %v379 = vpop.f32.mrf.mxu0
    %v380 = vadd.f32 %v143, %v379
    %v381 = vpop.f32.mrf.mxu0
    %v382 = vadd.f32 %v143, %v381
    %383 = vmatmul.bf16.gmra.mxu0 %v94
    %v384 = vpop.f32.mrf.mxu0
    %v385 = vadd.f32 %v143, %v384
    %v386 = vpop.f32.mrf.mxu0
    %v387 = vadd.f32 %v143, %v386
    %388 = vmatmul.bf16.gmra.mxu0 %v95
    %v389 = vpop.f32.mrf.mxu0
    %v390 = vadd.f32 %v143, %v389
    %v391 = vpop.f32.mrf.mxu0
    %v392 = vadd.f32 %v143, %v391
    %393 = vmatmul.bf16.gmra.mxu0 %v96
    %v394 = vpop.f32.mrf.mxu0
    %v395 = vadd.f32 %v143, %v394
    %v396 = vpop.f32.mrf.mxu0
    %v397 = vadd.f32 %v143, %v396
    %398 = vmatmul.bf16.gmra.mxu0 %v97
    %v399 = vpop.f32.mrf.mxu0
    %v400 = vadd.f32 %v143, %v399
    %v401 = vpop.f32.mrf.mxu0
    %v402 = vadd.f32 %v143, %v401
    %403 = vmatmul.bf16.gmra.mxu0 %v98
    %v404 = vpop.f32.mrf.mxu0
    %v405 = vadd.f32 %v143, %v404
    %v406 = vpop.f32.mrf.mxu0
    %v407 = vadd.f32 %v143, %v406
    %408 = vmatmul.bf16.gmra.mxu0 %v99
    %v409 = vpop.f32.mrf.mxu0
    %v410 = vadd.f32 %v143, %v409
    %v411 = vpop.f32.mrf.mxu0
    %v412 = vadd.f32 %v143, %v411
    %413 = vmatmul.bf16.gmra.mxu0 %v100
    %v414 = vpop.f32.mrf.mxu0
    %v415 = vadd.f32 %v143, %v414
    %v416 = vpop.f32.mrf.mxu0
    %v417 = vadd.f32 %v143, %v416
    %418 = vmatmul.bf16.gmra.mxu0 %v101
    %v419 = vpop.f32.mrf.mxu0
    %v420 = vadd.f32 %v143, %v419
    %v421 = vpop.f32.mrf.mxu0
    %v422 = vadd.f32 %v143, %v421
    %423 = vmatmul.bf16.gmra.mxu0 %v102
    %v424 = vpop.f32.mrf.mxu0
    %v425 = vadd.f32 %v143, %v424
    %v426 = vpop.f32.mrf.mxu0
    %v427 = vadd.f32 %v143, %v426
    %428 = vmatmul.bf16.gmra.mxu0 %v103
    %v429 = vpop.f32.mrf.mxu0
    %v430 = vadd.f32 %v143, %v429
    %v431 = vpop.f32.mrf.mxu0
    %v432 = vadd.f32 %v143, %v431
    %433 = vmatmul.bf16.gmra.mxu0 %v104
    %v434 = vpop.f32.mrf.mxu0
    %v435 = vadd.f32 %v143, %v434
    %v436 = vpop.f32.mrf.mxu0
    %v437 = vadd.f32 %v143, %v436
    %438 = vmatmul.bf16.gmra.mxu0 %v105
    %v439 = vpop.f32.mrf.mxu0
    %v440 = vadd.f32 %v143, %v439
    %v441 = vpop.f32.mrf.mxu0
    %v442 = vadd.f32 %v143, %v441
    %443 = vmatmul.bf16.gmra.mxu0 %v106
    %v444 = vpop.f32.mrf.mxu0
    %v445 = vadd.f32 %v143, %v444
    %v446 = vpop.f32.mrf.mxu0
    %v447 = vadd.f32 %v143, %v446
    %448 = vmatmul.bf16.gmra.mxu0 %v107
    %v449 = vpop.f32.mrf.mxu0
    %v450 = vadd.f32 %v143, %v449
    %v451 = vpop.f32.mrf.mxu0
    %v452 = vadd.f32 %v143, %v451
    %453 = vdwg.mxu0
    %454 = vmatpush.bf16.msra.mxu0 %v251
    %455 = vmatpush.bf16.msra.mxu0 %v248
    %456 = vmatpush.bf16.msra.mxu0 %v245
    %457 = vmatpush.bf16.msra.mxu0 %v242
    %458 = vmatpush.bf16.msra.mxu0 %v239
    %459 = vmatpush.bf16.msra.mxu0 %v236
    %460 = vmatpush.bf16.msra.mxu0 %v233
    %461 = vmatpush.bf16.msra.mxu0 %v230
    %462 = vmatmul.bf16.gmra.mxu0 %v92
    %v463 = vpop.f32.mrf.mxu0
    %v464 = vadd.f32 %v144, %v463
    %v465 = vpop.f32.mrf.mxu0
    %v466 = vadd.f32 %v144, %v465
    %467 = vmatmul.bf16.gmra.mxu0 %v93
    %v468 = vpop.f32.mrf.mxu0
    %v469 = vadd.f32 %v144, %v468
    %v470 = vpop.f32.mrf.mxu0
    %v471 = vadd.f32 %v144, %v470
    %472 = vmatmul.bf16.gmra.mxu0 %v94
    %v473 = vpop.f32.mrf.mxu0
    %v474 = vadd.f32 %v144, %v473
    %v475 = vpop.f32.mrf.mxu0
    %v476 = vadd.f32 %v144, %v475
    %477 = vmatmul.bf16.gmra.mxu0 %v95
    %v478 = vpop.f32.mrf.mxu0
    %v479 = vadd.f32 %v144, %v478
    %v480 = vpop.f32.mrf.mxu0
    %v481 = vadd.f32 %v144, %v480
    %482 = vmatmul.bf16.gmra.mxu0 %v96
    %v483 = vpop.f32.mrf.mxu0
    %v484 = vadd.f32 %v144, %v483
    %v485 = vpop.f32.mrf.mxu0
    %v486 = vadd.f32 %v144, %v485
    %487 = vmatmul.bf16.gmra.mxu0 %v97
    %v488 = vpop.f32.mrf.mxu0
    %v489 = vadd.f32 %v144, %v488
    %v490 = vpop.f32.mrf.mxu0
    %v491 = vadd.f32 %v144, %v490
    %492 = vmatmul.bf16.gmra.mxu0 %v98
    %v493 = vpop.f32.mrf.mxu0
    %v494 = vadd.f32 %v144, %v493
    %v495 = vpop.f32.mrf.mxu0
    %v496 = vadd.f32 %v144, %v495
    %497 = vmatmul.bf16.gmra.mxu0 %v99
    %v498 = vpop.f32.mrf.mxu0
    %v499 = vadd.f32 %v144, %v498
    %v500 = vpop.f32.mrf.mxu0
    %v501 = vadd.f32 %v144, %v500
    %502 = vmatmul.bf16.gmra.mxu0 %v100
    %v503 = vpop.f32.mrf.mxu0
    %v504 = vadd.f32 %v144, %v503
    %v505 = vpop.f32.mrf.mxu0
    %v506 = vadd.f32 %v144, %v505
    %507 = vmatmul.bf16.gmra.mxu0 %v101
    %v508 = vpop.f32.mrf.mxu0
    %v509 = vadd.f32 %v144, %v508
    %v510 = vpop.f32.mrf.mxu0
    %v511 = vadd.f32 %v144, %v510
    %512 = vmatmul.bf16.gmra.mxu0 %v102
    %v513 = vpop.f32.mrf.mxu0
    %v514 = vadd.f32 %v144, %v513
    %v515 = vpop.f32.mrf.mxu0
    %v516 = vadd.f32 %v144, %v515
    %517 = vmatmul.bf16.gmra.mxu0 %v103
    %v518 = vpop.f32.mrf.mxu0
    %v519 = vadd.f32 %v144, %v518
    %v520 = vpop.f32.mrf.mxu0
    %v521 = vadd.f32 %v144, %v520
    %522 = vmatmul.bf16.gmra.mxu0 %v104
    %v523 = vpop.f32.mrf.mxu0
    %v524 = vadd.f32 %v144, %v523
    %v525 = vpop.f32.mrf.mxu0
    %v526 = vadd.f32 %v144, %v525
    %527 = vmatmul.bf16.gmra.mxu0 %v105
    %v528 = vpop.f32.mrf.mxu0
    %v529 = vadd.f32 %v144, %v528
    %v530 = vpop.f32.mrf.mxu0
    %v531 = vadd.f32 %v144, %v530
    %532 = vmatmul.bf16.gmra.mxu0 %v106
    %v533 = vpop.f32.mrf.mxu0
    %v534 = vadd.f32 %v144, %v533
    %v535 = vpop.f32.mrf.mxu0
    %v536 = vadd.f32 %v144, %v535
    %537 = vmatmul.bf16.gmra.mxu0 %v107
    %v538 = vpop.f32.mrf.mxu0
    %v539 = vadd.f32 %v144, %v538
    %v540 = vpop.f32.mrf.mxu0
    %v541 = vadd.f32 %v144, %v540
    %542 = vdwg.mxu0
    %v543 = vpack.c.bf16 %v375, %v286
    %v544 = vpack.c.bf16 %v464, %v464
    %v545 = vpack.c.bf16 %v377, %v288
    %v546 = vpack.c.bf16 %v466, %v466
    %v547 = vpack.c.bf16 %v380, %v291
    %v548 = vpack.c.bf16 %v469, %v469
    %v549 = vpack.c.bf16 %v382, %v293
    %v550 = vpack.c.bf16 %v471, %v471
    %v551 = vpack.c.bf16 %v385, %v296
    %v552 = vpack.c.bf16 %v474, %v474
    %v553 = vpack.c.bf16 %v387, %v298
    %v554 = vpack.c.bf16 %v476, %v476
    %v555 = vpack.c.bf16 %v390, %v301
    %v556 = vpack.c.bf16 %v479, %v479
    %v557 = vpack.c.bf16 %v392, %v303
    %v558 = vpack.c.bf16 %v481, %v481
    %v559 = vpack.c.bf16 %v395, %v306
    %v560 = vpack.c.bf16 %v484, %v484
    %v561 = vpack.c.bf16 %v397, %v308
    %v562 = vpack.c.bf16 %v486, %v486
    %v563 = vpack.c.bf16 %v400, %v311
    %v564 = vpack.c.bf16 %v489, %v489
    %v565 = vpack.c.bf16 %v402, %v313
    %v566 = vpack.c.bf16 %v491, %v491
    %v567 = vpack.c.bf16 %v405, %v316
    %v568 = vpack.c.bf16 %v494, %v494
    %v569 = vpack.c.bf16 %v407, %v318
    %v570 = vpack.c.bf16 %v496, %v496
    %v571 = vpack.c.bf16 %v410, %v321
    %v572 = vpack.c.bf16 %v499, %v499
    %v573 = vpack.c.bf16 %v412, %v323
    %v574 = vpack.c.bf16 %v501, %v501
    %v575 = vpack.c.bf16 %v415, %v326
    %v576 = vpack.c.bf16 %v504, %v504
    %v577 = vpack.c.bf16 %v417, %v328
    %v578 = vpack.c.bf16 %v506, %v506
    %v579 = vpack.c.bf16 %v420, %v331
    %v580 = vpack.c.bf16 %v509, %v509
    %v581 = vpack.c.bf16 %v422, %v333
    %v582 = vpack.c.bf16 %v511, %v511
    %v583 = vpack.c.bf16 %v425, %v336
    %v584 = vpack.c.bf16 %v514, %v514
    %v585 = vpack.c.bf16 %v427, %v338
    %v586 = vpack.c.bf16 %v516, %v516
    %v587 = vpack.c.bf16 %v430, %v341
    %v588 = vpack.c.bf16 %v519, %v519
    %v589 = vpack.c.bf16 %v432, %v343
    %v590 = vpack.c.bf16 %v521, %v521
    %v591 = vpack.c.bf16 %v435, %v346
    %v592 = vpack.c.bf16 %v524, %v524
    %v593 = vpack.c.bf16 %v437, %v348
    %v594 = vpack.c.bf16 %v526, %v526
    %v595 = vpack.c.bf16 %v440, %v351
    %v596 = vpack.c.bf16 %v529, %v529
    %v597 = vpack.c.bf16 %v442, %v353
    %v598 = vpack.c.bf16 %v531, %v531
    %v599 = vpack.c.bf16 %v445, %v356
    %v600 = vpack.c.bf16 %v534, %v534
    %v601 = vpack.c.bf16 %v447, %v358
    %v602 = vpack.c.bf16 %v536, %v536
    %v603 = vpack.c.bf16 %v450, %v361
    %v604 = vpack.c.bf16 %v539, %v539
    %v605 = vpack.c.bf16 %v452, %v363
    %v606 = vpack.c.bf16 %v541, %v541
    %607 = vst [vmem:[#allocation8] sm:$0xff] %v543
    %608 = vst [vmem:[#allocation8 + $0x8] sm:$0xf] %v544
    %609 = vst [vmem:[#allocation8 + $0xc] sm:$0xff] %v545
    %610 = vst [vmem:[#allocation8 + $0x14] sm:$0xf] %v546
    %611 = vst [vmem:[#allocation8 + $0x18] sm:$0xff] %v547
    %612 = vst [vmem:[#allocation8 + $0x20] sm:$0xf] %v548
    %613 = vst [vmem:[#allocation8 + $0x24] sm:$0xff] %v549
    %614 = vst [vmem:[#allocation8 + $0x2c] sm:$0xf] %v550
    %615 = vst [vmem:[#allocation8 + $0x30] sm:$0xff] %v551
    %616 = vst [vmem:[#allocation8 + $0x38] sm:$0xf] %v552
    %617 = vst [vmem:[#allocation8 + $0x3c] sm:$0xff] %v553
    %618 = vst [vmem:[#allocation8 + $0x44] sm:$0xf] %v554
    %619 = vst [vmem:[#allocation8 + $0x48] sm:$0xff] %v555
    %620 = vst [vmem:[#allocation8 + $0x50] sm:$0xf] %v556
    %621 = vst [vmem:[#allocation8 + $0x54] sm:$0xff] %v557
    %622 = vst [vmem:[#allocation8 + $0x5c] sm:$0xf] %v558
    %623 = vst [vmem:[#allocation8 + $0x60] sm:$0xff] %v559
    %624 = vst [vmem:[#allocation8 + $0x68] sm:$0xf] %v560
    %625 = vst [vmem:[#allocation8 + $0x6c] sm:$0xff] %v561
    %626 = vst [vmem:[#allocation8 + $0x74] sm:$0xf] %v562
    %627 = vst [vmem:[#allocation8 + $0x78] sm:$0xff] %v563
    %628 = vst [vmem:[#allocation8 + $0x80] sm:$0xf] %v564
    %629 = vst [vmem:[#allocation8 + $0x84] sm:$0xff] %v565
    %630 = vst [vmem:[#allocation8 + $0x8c] sm:$0xf] %v566
    %631 = vst [vmem:[#allocation8 + $0x90] sm:$0xff] %v567
    %632 = vst [vmem:[#allocation8 + $0x98] sm:$0xf] %v568
    %633 = vst [vmem:[#allocation8 + $0x9c] sm:$0xff] %v569
    %634 = vst [vmem:[#allocation8 + $0xa4] sm:$0xf] %v570
    %635 = vst [vmem:[#allocation8 + $0xa8] sm:$0xff] %v571
    %636 = vst [vmem:[#allocation8 + $0xb0] sm:$0xf] %v572
    %637 = vst [vmem:[#allocation8 + $0xb4] sm:$0xff] %v573
    %638 = vst [vmem:[#allocation8 + $0xbc] sm:$0xf] %v574
    %639 = vst [vmem:[#allocation8 + $0xc0] sm:$0xff] %v575
    %640 = vst [vmem:[#allocation8 + $0xc8] sm:$0xf] %v576
    %641 = vst [vmem:[#allocation8 + $0xcc] sm:$0xff] %v577
    %642 = vst [vmem:[#allocation8 + $0xd4] sm:$0xf] %v578
    %643 = vst [vmem:[#allocation8 + $0xd8] sm:$0xff] %v579
    %644 = vst [vmem:[#allocation8 + $0xe0] sm:$0xf] %v580
    %645 = vst [vmem:[#allocation8 + $0xe4] sm:$0xff] %v581
    %646 = vst [vmem:[#allocation8 + $0xec] sm:$0xf] %v582
    %647 = vst [vmem:[#allocation8 + $0xf0] sm:$0xff] %v583
    %648 = vst [vmem:[#allocation8 + $0xf8] sm:$0xf] %v584
    %649 = vst [vmem:[#allocation8 + $0xfc] sm:$0xff] %v585
    %650 = vst [vmem:[#allocation8 + $0x104] sm:$0xf] %v586
    %651 = vst [vmem:[#allocation8 + $0x108] sm:$0xff] %v587
    %652 = vst [vmem:[#allocation8 + $0x110] sm:$0xf] %v588
    %653 = vst [vmem:[#allocation8 + $0x114] sm:$0xff] %v589
    %654 = vst [vmem:[#allocation8 + $0x11c] sm:$0xf] %v590
    %655 = vst [vmem:[#allocation8 + $0x120] sm:$0xff] %v591
    %656 = vst [vmem:[#allocation8 + $0x128] sm:$0xf] %v592
    %657 = vst [vmem:[#allocation8 + $0x12c] sm:$0xff] %v593
    %658 = vst [vmem:[#allocation8 + $0x134] sm:$0xf] %v594
    %659 = vst [vmem:[#allocation8 + $0x138] sm:$0xff] %v595
    %660 = vst [vmem:[#allocation8 + $0x140] sm:$0xf] %v596
    %661 = vst [vmem:[#allocation8 + $0x144] sm:$0xff] %v597
    %662 = vst [vmem:[#allocation8 + $0x14c] sm:$0xf] %v598
    %663 = vst [vmem:[#allocation8 + $0x150] sm:$0xff] %v599
    %664 = vst [vmem:[#allocation8 + $0x158] sm:$0xf] %v600
    %665 = vst [vmem:[#allocation8 + $0x15c] sm:$0xff] %v601
    %666 = vst [vmem:[#allocation8 + $0x164] sm:$0xf] %v602
    %667 = vst [vmem:[#allocation8 + $0x168] sm:$0xff] %v603
    %668 = vst [vmem:[#allocation8 + $0x170] sm:$0xf] %v604
    %669 = vst [vmem:[#allocation8 + $0x174] sm:$0xff] %v605
    %670 = vst [vmem:[#allocation8 + $0x17c] sm:$0xf] %v606
    // Predicated region
    $region26: #{tpu_custom_call.1} parent=1 // pred_check
      _
    $region27: #{tpu_custom_call.1} parent=1 // pred_check_branch
      %672 = sbr.rel (0) target = $region29
    $region28: #{tpu_custom_call.1} parent=1 // pred_region
      %674 = vsyncadd [#allocation4], 0
      %s675 = sshll.u32 [#allocation8], 4
      %s676 = int_to_ptr.vmem [resolvable:$true] %s675
      %s677 = sshll.u32 %s3, 4
      %s678 = int_to_ptr.hbm [resolvable:$true] %s677
      %683 = dma.vmem_to_hbm [thread:$0]  %s676, 6144, %s678, [#allocation4], 192, 192, 12
    $region29: #{tpu_custom_call.1} parent=1 // pred_fallthru
      _
    // Predicated region
    $region30: #{tpu_custom_call.1} parent=1 // pred_check
      _
    $region31: #{tpu_custom_call.1} parent=1 // pred_check_branch
      %685 = sbr.rel (0) target = $region33
    $region32: #{tpu_custom_call.1} parent=1 // pred_region
      %687 = dma.done [#allocation4], 6144
    $region33: #{tpu_custom_call.1} parent=1 // pred_fallthru
      _
    %688 = vsyncpa [#allocation3], 1
    %689 = vsyncpa [#allocation6], 1
    %690 = vsyncpa [#allocation4], 1

</llo_original>
